<compile_context>
chip_gen: v7x
topology: tpu7x:2x2x1
jax: 0.10.0
libtpu: 0.0.40
codegen_flags: <defaults>
</compile_context>

<pallas_src>
import jax
import jax.numpy as jnp
from jax.experimental import pallas as pl
from jax.experimental.pallas import tpu as pltpu


def rnn_kernel(x_ref, len_ref, wih_ref, whh_ref, b_ref, wo_ref, bo_ref,
               out_ref, h_scr, acc_scr):
    # x_ref:   (Bt, Tt, D) f32   current time-chunk of the batch_first input
    # len_ref: (Bt, 1)     i32   sequence lengths
    # wih_ref: (D, H)            W_ih^T
    # whh_ref: (H, H)            W_hh^T
    # b_ref:   (1, H)            b_ih + b_hh
    # wo_ref:  (H, O)            W_out^T
    # bo_ref:  (1, O)            b_out
    # out_ref: (Bt, O)           log-softmax output (written at last T block)
    # h_scr / acc_scr: (Bt, H)   persistent hidden state / masked hidden-state sum
    t_blk = pl.program_id(1)
    n_t = pl.num_programs(1)
    Bt, Tt, D = x_ref.shape

    @pl.when(t_blk == 0)
    def _init():
        h_scr[...] = jnp.zeros_like(h_scr)
        acc_scr[...] = jnp.zeros_like(acc_scr)

    # Hoisted input projection: one big MXU matmul per time-chunk, bias folded in.
    xw = jnp.dot(x_ref[...].reshape(Bt * Tt, D), wih_ref[...],
                 preferred_element_type=jnp.float32)
    xw = (xw + b_ref[...]).reshape(Bt, Tt, xw.shape[-1])

    whh = whh_ref[...]              # hoisted out of the recurrence
    lens = len_ref[...]             # (Bt, 1) int32
    t0 = t_blk * Tt

    h = h_scr[...]
    acc = acc_scr[...]
    for tl in range(Tt):            # static unroll: LLO can overlap adds with MXU
        h = jnp.tanh(xw[:, tl, :] +
                     jnp.dot(h, whh, preferred_element_type=jnp.float32))
        acc = acc + jnp.where(t0 + tl < lens, h, 0.0)   # length mask, computed on VPU
    h_scr[...] = h
    acc_scr[...] = acc

    @pl.when(t_blk == n_t - 1)
    def _finalize():
        # Final Linear + LogSoftmax(dim=1)
        z = jnp.dot(acc, wo_ref[...], preferred_element_type=jnp.float32) + bo_ref[...]
        zmax = jnp.max(z, axis=1, keepdims=True)
        shifted = z - zmax
        lse = jnp.log(jnp.sum(jnp.exp(shifted), axis=1, keepdims=True))
        out_ref[...] = (shifted - lse).astype(out_ref.dtype)


def rnn_forward(x, lengths, params, *, t_tile=None, b_tile=None):
    """x: (B, T, D); lengths: (B,) int. Returns (B, 5) log-probabilities."""
    x = x.astype(jnp.float32)
    B, T, D = x.shape
    H = params["w_hh"].shape[0]
    O = params["w_out"].shape[0]

    # T streamed in chunks (multiple of 8 sublanes unless it covers the full T).
    if t_tile is None:
        t_tile = T if T <= 64 else 64
    if t_tile != T:
        assert t_tile % 8 == 0, "t_tile must be a multiple of 8 (or equal to T)"
    # Batch block: full batch for small B; 128-row blocks (parallel across cores) else.
    if b_tile is None:
        b_tile = B if B <= 128 else 128

    n_b = pl.cdiv(B, b_tile)
    n_t = pl.cdiv(T, t_tile)

    lens2d = lengths.astype(jnp.int32).reshape(B, 1)
    wih_t = params["w_ih"].T.astype(jnp.float32)                 # (D, H)
    whh_t = params["w_hh"].T.astype(jnp.float32)                 # (H, H)
    bias = (params["b_ih"] + params["b_hh"]).reshape(1, H).astype(jnp.float32)
    wo_t = params["w_out"].T.astype(jnp.float32)                 # (H, O)
    bo = params["b_out"].reshape(1, O).astype(jnp.float32)

    return pl.pallas_call(
        rnn_kernel,
        out_shape=jax.ShapeDtypeStruct((B, O), jnp.float32),
        grid=(n_b, n_t),
        in_specs=[
            pl.BlockSpec((b_tile, t_tile, D), lambda bb, tt: (bb, tt, 0)),  # x chunks
            pl.BlockSpec((b_tile, 1), lambda bb, tt: (bb, 0)),              # lengths
            pl.BlockSpec((D, H), lambda bb, tt: (0, 0)),                    # W_ih^T
            pl.BlockSpec((H, H), lambda bb, tt: (0, 0)),                    # W_hh^T
            pl.BlockSpec((1, H), lambda bb, tt: (0, 0)),                    # bias
            pl.BlockSpec((H, O), lambda bb, tt: (0, 0)),                    # W_out^T
            pl.BlockSpec((1, O), lambda bb, tt: (0, 0)),                    # b_out
        ],
        out_specs=pl.BlockSpec((b_tile, O), lambda bb, tt: (bb, 0)),
        scratch_shapes=[pltpu.VMEM((b_tile, H), jnp.float32),   # hidden state
                        pltpu.VMEM((b_tile, H), jnp.float32)],  # masked sum
        compiler_params=pltpu.CompilerParams(
            dimension_semantics=("parallel", "arbitrary")),
    )(x, lens2d, wih_t, whh_t, bias, wo_t, bo)


def rnn_reference(x, lengths, params):
    """Pure-JAX reference matching the PyTorch forward semantics."""
    B, T, D = x.shape
    H = params["w_hh"].shape[0]

    def step(h, x_t):
        h_new = jnp.tanh(x_t @ params["w_ih"].T + params["b_ih"]
                         + h @ params["w_hh"].T + params["b_hh"])
        return h_new, h_new

    h0 = jnp.zeros((B, H), jnp.float32)
    _, hs = jax.lax.scan(step, h0, jnp.transpose(x, (1, 0, 2)))
    hs = jnp.transpose(hs, (1, 0, 2))                                   # (B, T, H)
    mask = (jnp.arange(T)[None, :] < lengths[:, None]).astype(jnp.float32)
    summed = jnp.sum(hs * mask[:, :, None], axis=1)                     # (B, H)
    z = summed @ params["w_out"].T + params["b_out"]
    return jax.nn.log_softmax(z, axis=1)


def init_params(key, input_dim, h, output_dim=5):
    # nn.RNN / nn.Linear shapes; uniform(-1/sqrt(h), 1/sqrt(h)) like PyTorch's default.
    ks = jax.random.split(key, 6)
    s = 1.0 / jnp.sqrt(h)
    return {
        "w_ih": jax.random.uniform(ks[0], (h, input_dim), jnp.float32, -s, s),
        "w_hh": jax.random.uniform(ks[1], (h, h), jnp.float32, -s, s),
        "b_ih": jax.random.uniform(ks[2], (h,), jnp.float32, -s, s),
        "b_hh": jax.random.uniform(ks[3], (h,), jnp.float32, -s, s),
        "w_out": jax.random.uniform(ks[4], (output_dim, h), jnp.float32, -s, s),
        "b_out": jax.random.uniform(ks[5], (output_dim,), jnp.float32, -s, s),
    }


if __name__ == "__main__":
    B, T, D, H = 2, 8, 16, 32

    key = jax.random.PRNGKey(0)
    k_x, k_p = jax.random.split(key)
    x = jax.random.normal(k_x, (B, T, D), jnp.float32)
    lengths = jnp.array([8, 5], dtype=jnp.int32)
    params = init_params(k_p, D, H)

    out = rnn_forward(x, lengths, params)
    out = jax.block_until_ready(out)

    ref = rnn_reference(x, lengths, params)
    assert out.shape == (B, 5)
    assert jnp.allclose(out, ref, atol=1e-4, rtol=1e-4), (out, ref)

    print("KERNEL_OK")
</pallas_src>

<mosaic_0001>
module attributes {stable_mosaic.version = 11 : i64} {
  func.func @rnn_kernel(%arg0: i32, %arg1: i32, %arg2: memref<2x8x16xf32, #tpu.memory_space<vmem>>, %arg3: memref<2x1xi32, #tpu.memory_space<vmem>>, %arg4: memref<16x32xf32, #tpu.memory_space<vmem>>, %arg5: memref<32x32xf32, #tpu.memory_space<vmem>>, %arg6: memref<1x32xf32, #tpu.memory_space<vmem>>, %arg7: memref<32x5xf32, #tpu.memory_space<vmem>>, %arg8: memref<1x5xf32, #tpu.memory_space<vmem>>, %arg9: memref<2x5xf32, #tpu.memory_space<vmem>>, %arg10: memref<2x32xf32, #tpu.memory_space<vmem>>, %arg11: memref<2x32xf32, #tpu.memory_space<vmem>>) attributes {dimension_semantics = [#tpu.dimension_semantics<parallel>, #tpu.dimension_semantics<arbitrary>], iteration_bounds = array<i64: 1, 1>, scalar_prefetch = 0 : i64, scratch_operands = 2 : i64, tpu.core_type = #tpu.core_type<tc>, window_params = [{transform_indices = @transform_0, window_bounds = array<i64: 2, 8, 16>}, {transform_indices = @transform_1, window_bounds = array<i64: 2, 1>}, {pipeline_mode = #tpu.pipeline_mode<synchronous>, transform_indices = @transform_2, window_bounds = array<i64: 16, 32>}, {pipeline_mode = #tpu.pipeline_mode<synchronous>, transform_indices = @transform_3, window_bounds = array<i64: 32, 32>}, {pipeline_mode = #tpu.pipeline_mode<synchronous>, transform_indices = @transform_4, window_bounds = array<i64: 1, 32>}, {pipeline_mode = #tpu.pipeline_mode<synchronous>, transform_indices = @transform_5, window_bounds = array<i64: 32, 5>}, {pipeline_mode = #tpu.pipeline_mode<synchronous>, transform_indices = @transform_6, window_bounds = array<i64: 1, 5>}, {transform_indices = @transform_7, window_bounds = array<i64: 2, 5>}]} {
    %c0_i32 = arith.constant 0 : i32
    %0 = arith.cmpi eq, %arg1, %c0_i32 : i32
    %1 = arith.extui %0 : i1 to i32
    %c0_i32_0 = arith.constant 0 : i32
    %2 = arith.cmpi ne, %1, %c0_i32_0 : i32
    scf.if %2 {
      %cst_38 = arith.constant 0.000000e+00 : f32
      %125 = vector.broadcast %cst_38 : f32 to vector<2x32xf32>
      %c0_39 = arith.constant 0 : index
      %c0_40 = arith.constant 0 : index
      %126 = vector.load %arg10[%c0_39, %c0_40] : memref<2x32xf32, #tpu.memory_space<vmem>>, vector<2x32xf32>
      tpu.vector_store %arg10[%c0_39, %c0_40], %125 {strides = array<i32>} : memref<2x32xf32, #tpu.memory_space<vmem>>, vector<2x32xf32>,
      %cst_41 = arith.constant 0.000000e+00 : f32
      %127 = vector.broadcast %cst_41 : f32 to vector<2x32xf32>
      %c0_42 = arith.constant 0 : index
      %c0_43 = arith.constant 0 : index
      %128 = vector.load %arg11[%c0_42, %c0_43] : memref<2x32xf32, #tpu.memory_space<vmem>>, vector<2x32xf32>
      tpu.vector_store %arg11[%c0_42, %c0_43], %127 {strides = array<i32>} : memref<2x32xf32, #tpu.memory_space<vmem>>, vector<2x32xf32>,
    } else {
    }
    %c0 = arith.constant 0 : index
    %c0_1 = arith.constant 0 : index
    %c0_2 = arith.constant 0 : index
    %3 = vector.load %arg2[%c0, %c0_1, %c0_2] : memref<2x8x16xf32, #tpu.memory_space<vmem>>, vector<2x8x16xf32>
    %4 = vector.shape_cast %3 : vector<2x8x16xf32> to vector<16x16xf32>
    %c0_3 = arith.constant 0 : index
    %c0_4 = arith.constant 0 : index
    %5 = vector.load %arg4[%c0_3, %c0_4] : memref<16x32xf32, #tpu.memory_space<vmem>>, vector<16x32xf32>
    %cst = arith.constant dense<0.000000e+00> : vector<16x32xf32>
    %6 = tpu.matmul %4, %5, %cst {dimension_numbers = #tpu.dot_dimension_numbers<[1], [0], [0], [1], [0, 0, 1, 1], [], []>} : vector<16x16xf32>, vector<16x32xf32>, vector<16x32xf32> -> vector<16x32xf32>
    %c0_5 = arith.constant 0 : index
    %c0_6 = arith.constant 0 : index
    %7 = vector.load %arg6[%c0_5, %c0_6] : memref<1x32xf32, #tpu.memory_space<vmem>>, vector<1x32xf32>
    %8 = vector.broadcast %7 : vector<1x32xf32> to vector<16x32xf32>
    %9 = arith.addf %6, %8 : vector<16x32xf32>
    %10 = vector.shape_cast %9 : vector<16x32xf32> to vector<2x8x32xf32>
    %c0_7 = arith.constant 0 : index
    %c0_8 = arith.constant 0 : index
    %11 = vector.load %arg5[%c0_7, %c0_8] : memref<32x32xf32, #tpu.memory_space<vmem>>, vector<32x32xf32>
    %c0_9 = arith.constant 0 : index
    %c0_10 = arith.constant 0 : index
    %12 = vector.load %arg3[%c0_9, %c0_10] : memref<2x1xi32, #tpu.memory_space<vmem>>, vector<2x1xi32>
    %c8_i32 = arith.constant 8 : i32
    %13 = arith.muli %arg1, %c8_i32 : i32
    %c0_11 = arith.constant 0 : index
    %c0_12 = arith.constant 0 : index
    %14 = vector.load %arg10[%c0_11, %c0_12] : memref<2x32xf32, #tpu.memory_space<vmem>>, vector<2x32xf32>
    %c0_13 = arith.constant 0 : index
    %c0_14 = arith.constant 0 : index
    %15 = vector.load %arg11[%c0_13, %c0_14] : memref<2x32xf32, #tpu.memory_space<vmem>>, vector<2x32xf32>
    %16 = vector.extract_strided_slice %10 {offsets = [0, 0, 0], sizes = [2, 1, 32], strides = [1, 1, 1]} : vector<2x8x32xf32> to vector<2x1x32xf32>
    %17 = vector.shape_cast %16 : vector<2x1x32xf32> to vector<2x32xf32>
    %cst_15 = arith.constant dense<0.000000e+00> : vector<2x32xf32>
    %18 = tpu.matmul %14, %11, %cst_15 {dimension_numbers = #tpu.dot_dimension_numbers<[1], [0], [0], [1], [0, 0, 1, 1], [], []>} : vector<2x32xf32>, vector<32x32xf32>, vector<2x32xf32> -> vector<2x32xf32>
    %19 = arith.addf %17, %18 : vector<2x32xf32>
    %20 = math.tanh %19 : vector<2x32xf32>
    %c0_i32_16 = arith.constant 0 : i32
    %21 = arith.addi %13, %c0_i32_16 : i32
    %22 = vector.broadcast %21 : i32 to vector<2x1xi32>
    %23 = arith.cmpi slt, %22, %12 : vector<2x1xi32>
    %cst_17 = arith.constant 0.000000e+00 : f32
    %24 = vector.shape_cast %23 : vector<2x1xi1> to vector<2x1xi1>
    %25 = vector.broadcast %24 : vector<2x1xi1> to vector<2x32xi1>
    %26 = vector.broadcast %cst_17 : f32 to vector<2x32xf32>
    %27 = arith.select %25, %20, %26 : vector<2x32xi1>, vector<2x32xf32>
    %28 = arith.addf %15, %27 : vector<2x32xf32>
    %29 = vector.extract_strided_slice %10 {offsets = [0, 1, 0], sizes = [2, 1, 32], strides = [1, 1, 1]} : vector<2x8x32xf32> to vector<2x1x32xf32>
    %30 = vector.shape_cast %29 : vector<2x1x32xf32> to vector<2x32xf32>
    %cst_18 = arith.constant dense<0.000000e+00> : vector<2x32xf32>
    %31 = tpu.matmul %20, %11, %cst_18 {dimension_numbers = #tpu.dot_dimension_numbers<[1], [0], [0], [1], [0, 0, 1, 1], [], []>} : vector<2x32xf32>, vector<32x32xf32>, vector<2x32xf32> -> vector<2x32xf32>
    %32 = arith.addf %30, %31 : vector<2x32xf32>
    %33 = math.tanh %32 : vector<2x32xf32>
    %c1_i32 = arith.constant 1 : i32
    %34 = arith.addi %13, %c1_i32 : i32
    %35 = vector.broadcast %34 : i32 to vector<2x1xi32>
    %36 = arith.cmpi slt, %35, %12 : vector<2x1xi32>
    %cst_19 = arith.constant 0.000000e+00 : f32
    %37 = vector.shape_cast %36 : vector<2x1xi1> to vector<2x1xi1>
    %38 = vector.broadcast %37 : vector<2x1xi1> to vector<2x32xi1>
    %39 = vector.broadcast %cst_19 : f32 to vector<2x32xf32>
    %40 = arith.select %38, %33, %39 : vector<2x32xi1>, vector<2x32xf32>
    %41 = arith.addf %28, %40 : vector<2x32xf32>
    %42 = vector.extract_strided_slice %10 {offsets = [0, 2, 0], sizes = [2, 1, 32], strides = [1, 1, 1]} : vector<2x8x32xf32> to vector<2x1x32xf32>
    %43 = vector.shape_cast %42 : vector<2x1x32xf32> to vector<2x32xf32>
    %cst_20 = arith.constant dense<0.000000e+00> : vector<2x32xf32>
    %44 = tpu.matmul %33, %11, %cst_20 {dimension_numbers = #tpu.dot_dimension_numbers<[1], [0], [0], [1], [0, 0, 1, 1], [], []>} : vector<2x32xf32>, vector<32x32xf32>, vector<2x32xf32> -> vector<2x32xf32>
    %45 = arith.addf %43, %44 : vector<2x32xf32>
    %46 = math.tanh %45 : vector<2x32xf32>
    %c2_i32 = arith.constant 2 : i32
    %47 = arith.addi %13, %c2_i32 : i32
    %48 = vector.broadcast %47 : i32 to vector<2x1xi32>
    %49 = arith.cmpi slt, %48, %12 : vector<2x1xi32>
    %cst_21 = arith.constant 0.000000e+00 : f32
    %50 = vector.shape_cast %49 : vector<2x1xi1> to vector<2x1xi1>
    %51 = vector.broadcast %50 : vector<2x1xi1> to vector<2x32xi1>
    %52 = vector.broadcast %cst_21 : f32 to vector<2x32xf32>
    %53 = arith.select %51, %46, %52 : vector<2x32xi1>, vector<2x32xf32>
    %54 = arith.addf %41, %53 : vector<2x32xf32>
    %55 = vector.extract_strided_slice %10 {offsets = [0, 3, 0], sizes = [2, 1, 32], strides = [1, 1, 1]} : vector<2x8x32xf32> to vector<2x1x32xf32>
    %56 = vector.shape_cast %55 : vector<2x1x32xf32> to vector<2x32xf32>
    %cst_22 = arith.constant dense<0.000000e+00> : vector<2x32xf32>
    %57 = tpu.matmul %46, %11, %cst_22 {dimension_numbers = #tpu.dot_dimension_numbers<[1], [0], [0], [1], [0, 0, 1, 1], [], []>} : vector<2x32xf32>, vector<32x32xf32>, vector<2x32xf32> -> vector<2x32xf32>
    %58 = arith.addf %56, %57 : vector<2x32xf32>
    %59 = math.tanh %58 : vector<2x32xf32>
    %c3_i32 = arith.constant 3 : i32
    %60 = arith.addi %13, %c3_i32 : i32
    %61 = vector.broadcast %60 : i32 to vector<2x1xi32>
    %62 = arith.cmpi slt, %61, %12 : vector<2x1xi32>
    %cst_23 = arith.constant 0.000000e+00 : f32
    %63 = vector.shape_cast %62 : vector<2x1xi1> to vector<2x1xi1>
    %64 = vector.broadcast %63 : vector<2x1xi1> to vector<2x32xi1>
    %65 = vector.broadcast %cst_23 : f32 to vector<2x32xf32>
    %66 = arith.select %64, %59, %65 : vector<2x32xi1>, vector<2x32xf32>
    %67 = arith.addf %54, %66 : vector<2x32xf32>
    %68 = vector.extract_strided_slice %10 {offsets = [0, 4, 0], sizes = [2, 1, 32], strides = [1, 1, 1]} : vector<2x8x32xf32> to vector<2x1x32xf32>
    %69 = vector.shape_cast %68 : vector<2x1x32xf32> to vector<2x32xf32>
    %cst_24 = arith.constant dense<0.000000e+00> : vector<2x32xf32>
    %70 = tpu.matmul %59, %11, %cst_24 {dimension_numbers = #tpu.dot_dimension_numbers<[1], [0], [0], [1], [0, 0, 1, 1], [], []>} : vector<2x32xf32>, vector<32x32xf32>, vector<2x32xf32> -> vector<2x32xf32>
    %71 = arith.addf %69, %70 : vector<2x32xf32>
    %72 = math.tanh %71 : vector<2x32xf32>
    %c4_i32 = arith.constant 4 : i32
    %73 = arith.addi %13, %c4_i32 : i32
    %74 = vector.broadcast %73 : i32 to vector<2x1xi32>
    %75 = arith.cmpi slt, %74, %12 : vector<2x1xi32>
    %cst_25 = arith.constant 0.000000e+00 : f32
    %76 = vector.shape_cast %75 : vector<2x1xi1> to vector<2x1xi1>
    %77 = vector.broadcast %76 : vector<2x1xi1> to vector<2x32xi1>
    %78 = vector.broadcast %cst_25 : f32 to vector<2x32xf32>
    %79 = arith.select %77, %72, %78 : vector<2x32xi1>, vector<2x32xf32>
    %80 = arith.addf %67, %79 : vector<2x32xf32>
    %81 = vector.extract_strided_slice %10 {offsets = [0, 5, 0], sizes = [2, 1, 32], strides = [1, 1, 1]} : vector<2x8x32xf32> to vector<2x1x32xf32>
    %82 = vector.shape_cast %81 : vector<2x1x32xf32> to vector<2x32xf32>
    %cst_26 = arith.constant dense<0.000000e+00> : vector<2x32xf32>
    %83 = tpu.matmul %72, %11, %cst_26 {dimension_numbers = #tpu.dot_dimension_numbers<[1], [0], [0], [1], [0, 0, 1, 1], [], []>} : vector<2x32xf32>, vector<32x32xf32>, vector<2x32xf32> -> vector<2x32xf32>
    %84 = arith.addf %82, %83 : vector<2x32xf32>
    %85 = math.tanh %84 : vector<2x32xf32>
    %c5_i32 = arith.constant 5 : i32
    %86 = arith.addi %13, %c5_i32 : i32
    %87 = vector.broadcast %86 : i32 to vector<2x1xi32>
    %88 = arith.cmpi slt, %87, %12 : vector<2x1xi32>
    %cst_27 = arith.constant 0.000000e+00 : f32
    %89 = vector.shape_cast %88 : vector<2x1xi1> to vector<2x1xi1>
    %90 = vector.broadcast %89 : vector<2x1xi1> to vector<2x32xi1>
    %91 = vector.broadcast %cst_27 : f32 to vector<2x32xf32>
    %92 = arith.select %90, %85, %91 : vector<2x32xi1>, vector<2x32xf32>
    %93 = arith.addf %80, %92 : vector<2x32xf32>
    %94 = vector.extract_strided_slice %10 {offsets = [0, 6, 0], sizes = [2, 1, 32], strides = [1, 1, 1]} : vector<2x8x32xf32> to vector<2x1x32xf32>
    %95 = vector.shape_cast %94 : vector<2x1x32xf32> to vector<2x32xf32>
    %cst_28 = arith.constant dense<0.000000e+00> : vector<2x32xf32>
    %96 = tpu.matmul %85, %11, %cst_28 {dimension_numbers = #tpu.dot_dimension_numbers<[1], [0], [0], [1], [0, 0, 1, 1], [], []>} : vector<2x32xf32>, vector<32x32xf32>, vector<2x32xf32> -> vector<2x32xf32>
    %97 = arith.addf %95, %96 : vector<2x32xf32>
    %98 = math.tanh %97 : vector<2x32xf32>
    %c6_i32 = arith.constant 6 : i32
    %99 = arith.addi %13, %c6_i32 : i32
    %100 = vector.broadcast %99 : i32 to vector<2x1xi32>
    %101 = arith.cmpi slt, %100, %12 : vector<2x1xi32>
    %cst_29 = arith.constant 0.000000e+00 : f32
    %102 = vector.shape_cast %101 : vector<2x1xi1> to vector<2x1xi1>
    %103 = vector.broadcast %102 : vector<2x1xi1> to vector<2x32xi1>
    %104 = vector.broadcast %cst_29 : f32 to vector<2x32xf32>
    %105 = arith.select %103, %98, %104 : vector<2x32xi1>, vector<2x32xf32>
    %106 = arith.addf %93, %105 : vector<2x32xf32>
    %107 = vector.extract_strided_slice %10 {offsets = [0, 7, 0], sizes = [2, 1, 32], strides = [1, 1, 1]} : vector<2x8x32xf32> to vector<2x1x32xf32>
    %108 = vector.shape_cast %107 : vector<2x1x32xf32> to vector<2x32xf32>
    %cst_30 = arith.constant dense<0.000000e+00> : vector<2x32xf32>
    %109 = tpu.matmul %98, %11, %cst_30 {dimension_numbers = #tpu.dot_dimension_numbers<[1], [0], [0], [1], [0, 0, 1, 1], [], []>} : vector<2x32xf32>, vector<32x32xf32>, vector<2x32xf32> -> vector<2x32xf32>
    %110 = arith.addf %108, %109 : vector<2x32xf32>
    %111 = math.tanh %110 : vector<2x32xf32>
    %c7_i32 = arith.constant 7 : i32
    %112 = arith.addi %13, %c7_i32 : i32
    %113 = vector.broadcast %112 : i32 to vector<2x1xi32>
    %114 = arith.cmpi slt, %113, %12 : vector<2x1xi32>
    %cst_31 = arith.constant 0.000000e+00 : f32
    %115 = vector.shape_cast %114 : vector<2x1xi1> to vector<2x1xi1>
    %116 = vector.broadcast %115 : vector<2x1xi1> to vector<2x32xi1>
    %117 = vector.broadcast %cst_31 : f32 to vector<2x32xf32>
    %118 = arith.select %116, %111, %117 : vector<2x32xi1>, vector<2x32xf32>
    %119 = arith.addf %106, %118 : vector<2x32xf32>
    %c0_32 = arith.constant 0 : index
    %c0_33 = arith.constant 0 : index
    %120 = vector.load %arg10[%c0_32, %c0_33] : memref<2x32xf32, #tpu.memory_space<vmem>>, vector<2x32xf32>
    tpu.vector_store %arg10[%c0_32, %c0_33], %111 {strides = array<i32>} : memref<2x32xf32, #tpu.memory_space<vmem>>, vector<2x32xf32>,
    %c0_34 = arith.constant 0 : index
    %c0_35 = arith.constant 0 : index
    %121 = vector.load %arg11[%c0_34, %c0_35] : memref<2x32xf32, #tpu.memory_space<vmem>>, vector<2x32xf32>
    tpu.vector_store %arg11[%c0_34, %c0_35], %119 {strides = array<i32>} : memref<2x32xf32, #tpu.memory_space<vmem>>, vector<2x32xf32>,
    %c0_i32_36 = arith.constant 0 : i32
    %122 = arith.cmpi eq, %arg1, %c0_i32_36 : i32
    %123 = arith.extui %122 : i1 to i32
    %c0_i32_37 = arith.constant 0 : i32
    %124 = arith.cmpi ne, %123, %c0_i32_37 : i32
    scf.if %124 {
      %c0_38 = arith.constant 0 : index
      %c0_39 = arith.constant 0 : index
      %125 = vector.load %arg7[%c0_38, %c0_39] : memref<32x5xf32, #tpu.memory_space<vmem>>, vector<32x5xf32>
      %cst_40 = arith.constant dense<0.000000e+00> : vector<2x5xf32>
      %126 = tpu.matmul %119, %125, %cst_40 {dimension_numbers = #tpu.dot_dimension_numbers<[1], [0], [0], [1], [0, 0, 1, 1], [], []>} : vector<2x32xf32>, vector<32x5xf32>, vector<2x5xf32> -> vector<2x5xf32>
      %c0_41 = arith.constant 0 : index
      %c0_42 = arith.constant 0 : index
      %127 = vector.load %arg8[%c0_41, %c0_42] : memref<1x5xf32, #tpu.memory_space<vmem>>, vector<1x5xf32>
      %128 = vector.broadcast %127 : vector<1x5xf32> to vector<2x5xf32>
      %129 = arith.addf %126, %128 : vector<2x5xf32>
      %cst_43 = arith.constant dense<0xFF800000> : vector<2xf32>
      %130 = vector.multi_reduction <maximumf>, %129, %cst_43 [1] : vector<2x5xf32> to vector<2xf32>
      %131 = vector.shape_cast %130 : vector<2xf32> to vector<2x1xf32>
      %132 = vector.broadcast %131 : vector<2x1xf32> to vector<2x5xf32>
      %133 = arith.subf %129, %132 : vector<2x5xf32>
      %134 = math.exp %133 : vector<2x5xf32>
      %cst_44 = arith.constant dense<0.000000e+00> : vector<2xf32>
      %135 = vector.multi_reduction <add>, %134, %cst_44 [1] : vector<2x5xf32> to vector<2xf32>
      %136 = vector.shape_cast %135 : vector<2xf32> to vector<2x1xf32>
      %137 = math.log %136 : vector<2x1xf32>
      %138 = vector.broadcast %137 : vector<2x1xf32> to vector<2x5xf32>
      %139 = arith.subf %133, %138 : vector<2x5xf32>
      %c0_45 = arith.constant 0 : index
      %c0_46 = arith.constant 0 : index
      %140 = vector.load %arg9[%c0_45, %c0_46] : memref<2x5xf32, #tpu.memory_space<vmem>>, vector<2x5xf32>
      tpu.vector_store %arg9[%c0_45, %c0_46], %139 {strides = array<i32>} : memref<2x5xf32, #tpu.memory_space<vmem>>, vector<2x5xf32>,
    } else {
    }
    return
  }
  func.func @transform_0(%arg0: i32, %arg1: i32) -> (i32, i32, i32) {
    %c0_i32 = arith.constant 0 : i32
    %c0_i32_0 = arith.constant 0 : i32
    return %arg0, %arg1, %c0_i32 : i32, i32, i32
  }
  func.func @transform_1(%arg0: i32, %arg1: i32) -> (i32, i32) {
    %c0_i32 = arith.constant 0 : i32
    %c0_i32_0 = arith.constant 0 : i32
    return %arg0, %c0_i32 : i32, i32
  }
  func.func @transform_2(%arg0: i32, %arg1: i32) -> (i32, i32) {
    %c0_i32 = arith.constant 0 : i32
    %c0_i32_0 = arith.constant 0 : i32
    %c0_i32_1 = arith.constant 0 : i32
    return %c0_i32, %c0_i32_0 : i32, i32
  }
  func.func @transform_3(%arg0: i32, %arg1: i32) -> (i32, i32) {
    %c0_i32 = arith.constant 0 : i32
    %c0_i32_0 = arith.constant 0 : i32
    %c0_i32_1 = arith.constant 0 : i32
    return %c0_i32, %c0_i32_0 : i32, i32
  }
  func.func @transform_4(%arg0: i32, %arg1: i32) -> (i32, i32) {
    %c0_i32 = arith.constant 0 : i32
    %c0_i32_0 = arith.constant 0 : i32
    %c0_i32_1 = arith.constant 0 : i32
    return %c0_i32, %c0_i32_0 : i32, i32
  }
  func.func @transform_5(%arg0: i32, %arg1: i32) -> (i32, i32) {
    %c0_i32 = arith.constant 0 : i32
    %c0_i32_0 = arith.constant 0 : i32
    %c0_i32_1 = arith.constant 0 : i32
    return %c0_i32, %c0_i32_0 : i32, i32
  }
  func.func @transform_6(%arg0: i32, %arg1: i32) -> (i32, i32) {
    %c0_i32 = arith.constant 0 : i32
    %c0_i32_0 = arith.constant 0 : i32
    %c0_i32_1 = arith.constant 0 : i32
    return %c0_i32, %c0_i32_0 : i32, i32
  }
  func.func @transform_7(%arg0: i32, %arg1: i32) -> (i32, i32) {
    %c0_i32 = arith.constant 0 : i32
    %c0_i32_0 = arith.constant 0 : i32
    return %arg0, %c0_i32 : i32, i32
  }
}

</mosaic_0001>

<llo_original>
// kernel: tpu_custom_call.1
$region0: #{tpu_custom_call.1}
  #allocation0 [shape = 'u32[]', space=smem, size = 0x4, offset = 0x4, fixed_abs, tag = 'smem constant byte address 0x4 - core index']
  #allocation1 [shape = 'u32[144,128]{1,0:T(1,128)}', space=vmem, size = 0x12000, scoped, tag = 'internal scratch']
  #allocation2 [shape = 'f32[2,32]{1,0:T(2,128)}', space=vmem, size = 0x400, scoped, tag = 'scratch operand']
  #allocation3 [shape = 'f32[2,32]{1,0:T(2,128)}', space=vmem, size = 0x400, scoped, tag = 'scratch operand']
  %s0 = inlined_call_operand.vmem [shape: f32[2,8,16], index: 0, kind: input, shape index: {}]
  %s1 = inlined_call_operand.vmem [shape: s32[2,1], index: 1, kind: input, shape index: {}]
  %s2 = inlined_call_operand.hbm [shape: f32[16,32], index: 2, kind: input, shape index: {}]
  %s3 = inlined_call_operand.vmem [shape: f32[32,32], index: 3, kind: input, shape index: {}]
  %s4 = inlined_call_operand.vmem [shape: f32[1,32], index: 4, kind: input, shape index: {}]
  %s5 = inlined_call_operand.vmem [shape: f32[32,5], index: 5, kind: input, shape index: {}]
  %s6 = inlined_call_operand.vmem [shape: f32[1,5], index: 6, kind: input, shape index: {}]
  %s7 = inlined_call_operand.hbm [shape: f32[2,5], index: 7, kind: output, shape index: {}]
  %s8 = sld [smem:[#allocation0]]
  $region50: #{tpu_custom_call.1} parent=0
    _
  %s10 = ssub.s32 1, %s8
  %s11 = scalar_select 0, %s10, %s8
  $region1: #{tpu_custom_call.1} parent=0
    #allocation4 [shape = 'u8[8192]{0}', space=vmem, size = 0x2000, scoped, tag = 'input window, operand 2, single buffered']
    #allocation5 [shape = 's32[1]{0}', space=sflag, size = 0x4, scoped, tag = 'scoped memory for tpu_custom_call.1']
    #allocation6 [shape = 's32[1]{0}', space=sflag, size = 0x4, scoped, tag = 'scoped memory for tpu_custom_call.1']
    #allocation7 [shape = 'u8[1024]{0}', space=vmem, size = 0x400, scoped, tag = 'output window, operand 0, single buffered']
    %12 = vsyncpa [#allocation5], 0
    %13 = vsyncpa [#allocation6], 0
    // Predicated region
    $region2: #{tpu_custom_call.1} parent=1 // pred_check
      _
    $region3: #{tpu_custom_call.1} parent=1 // pred_check_branch
      %15 = sbr.rel (0) target = $region5
    $region4: #{tpu_custom_call.1} parent=1 // pred_region
      _
    $region5: #{tpu_custom_call.1} parent=1 // pred_fallthru
      _
    // Predicated region
    $region6: #{tpu_custom_call.1} parent=1 // pred_check
      _
    $region7: #{tpu_custom_call.1} parent=1 // pred_check_branch
      %17 = sbr.rel (0) target = $region9
    $region8: #{tpu_custom_call.1} parent=1 // pred_region
      _
    $region9: #{tpu_custom_call.1} parent=1 // pred_fallthru
      _
    // Predicated region
    $region10: #{tpu_custom_call.1} parent=1 // pred_check
      _
    $region11: #{tpu_custom_call.1} parent=1 // pred_check_branch
      %19 = sbr.rel (0) target = $region13
    $region12: #{tpu_custom_call.1} parent=1 // pred_region
      %s21 = ssub.s32 256, 256
      %22 = vsyncadd [#allocation5], %s21
      %s23 = sshll.u32 [#allocation4], 4
      %s24 = int_to_ptr.vmem [resolvable:$true] %s23
      %29 = dma.hbm_to_vmem [thread:$0]  %s2, 256, %s24, [#allocation5], 128, 128, 8
    $region13: #{tpu_custom_call.1} parent=1 // pred_fallthru
      _
    // Predicated region
    $region14: #{tpu_custom_call.1} parent=1 // pred_check
      _
    $region15: #{tpu_custom_call.1} parent=1 // pred_check_branch
      %31 = sbr.rel (0) target = $region17
    $region16: #{tpu_custom_call.1} parent=1 // pred_region
      _
    $region17: #{tpu_custom_call.1} parent=1 // pred_fallthru
      _
    // Predicated region
    $region18: #{tpu_custom_call.1} parent=1 // pred_check
      _
    $region19: #{tpu_custom_call.1} parent=1 // pred_check_branch
      %33 = sbr.rel (0) target = $region21
    $region20: #{tpu_custom_call.1} parent=1 // pred_region
      _
    $region21: #{tpu_custom_call.1} parent=1 // pred_fallthru
      _
    // Predicated region
    $region22: #{tpu_custom_call.1} parent=1 // pred_check
      _
    $region23: #{tpu_custom_call.1} parent=1 // pred_check_branch
      %35 = sbr.rel (0) target = $region25
    $region24: #{tpu_custom_call.1} parent=1 // pred_region
      _
    $region25: #{tpu_custom_call.1} parent=1 // pred_fallthru
      _
    // Predicated region
    $region26: #{tpu_custom_call.1} parent=1 // pred_check
      _
    $region27: #{tpu_custom_call.1} parent=1 // pred_check_branch
      %37 = sbr.rel (0) target = $region29
    $region28: #{tpu_custom_call.1} parent=1 // pred_region
      _
    $region29: #{tpu_custom_call.1} parent=1 // pred_fallthru
      _
    // Predicated region
    $region30: #{tpu_custom_call.1} parent=1 // pred_check
      _
    $region31: #{tpu_custom_call.1} parent=1 // pred_check_branch
      %39 = sbr.rel (0) target = $region33
    $region32: #{tpu_custom_call.1} parent=1 // pred_region
      %40 = dma.done [#allocation5], 256
    $region33: #{tpu_custom_call.1} parent=1 // pred_fallthru
      _
    %p41 = scmp.eq.s32.totalorder 0, 0
    // Predicated region
    $region34: #{tpu_custom_call.1} parent=1 // pred_check
      %p42 = pneg %p41
    $region35: #{tpu_custom_call.1} parent=1 // pred_check_branch
      %44 = sbr.rel (%p42) target = $region37
    $region36: #{tpu_custom_call.1} parent=1 // pred_region
      %vm45 = vcmask 254976
      %46 = vst.msk [vmem:[#allocation2] sm:$0x3] %vm45, 0.0
      %47 = vst.msk [vmem:[#allocation3] sm:$0x3] %vm45, 0.0
    $region37: #{tpu_custom_call.1} parent=1 // pred_fallthru
      _
    %v48 = vld [vmem:[%s0] sm:$0xff]
    %v49 = vld [vmem:[%s0 + $0x8] sm:$0xff]
    %v50 = vld [vmem:[#allocation4] sm:$0xff]
    %v51 = vld [vmem:[#allocation4 + $0x8] sm:$0xff]
    %v52 = vld [vmem:[%s4] sm:$0x1]
    %v54 = vlaneseq
    %v55 = vshrl.u32 %v54, 7
    %v56 = vsub.s32 0, %v55
    %v57 = vrot.slane %v52, %v56
    %vm59 = vcmask 130048
    %v61 = vsel %vm59, %v48, 0
    %v64 = vsel %vm59, %v49, 0
    %66 = vmatprep.subr.mxu0 0.0
    %67 = vmatpush1.msra.mxu0 %v50
    %68 = vmatprep.subr.mxu0 0.0
    %69 = vmatpush1.msra.mxu0 %v51
    %70 = vmatprep.subr.mxu0 0.0
    %71 = vmatpush1.msra.mxu0 0.0
    %72 = vmatprep.subr.mxu0 0.0
    %73 = vmatpush1.msra.mxu0 0.0
    %74 = vmatprep.subr.mxu0 0.0
    %75 = vmatpush1.msra.mxu0 0.0
    %76 = vmatprep.subr.mxu0 0.0
    %77 = vmatpush1.msra.mxu0 0.0
    %78 = vmatprep.subr.mxu0 0.0
    %79 = vmatpush1.msra.mxu0 0.0
    %80 = vmatprep.subr.mxu0 0.0
    %81 = vmatpush1.msra.mxu0 0.0
    %82 = vmatprep.subr.mxu0 0.0
    %83 = vmatpush1.msra.mxu0 0.0
    %84 = vmatprep.subr.mxu0 0.0
    %85 = vmatpush1.msra.mxu0 0.0
    %86 = vmatprep.subr.mxu0 0.0
    %87 = vmatpush1.msra.mxu0 0.0
    %88 = vmatprep.subr.mxu0 0.0
    %89 = vmatpush1.msra.mxu0 0.0
    %90 = vmatprep.subr.mxu0 0.0
    %91 = vmatpush1.msra.mxu0 0.0
    %92 = vmatprep.subr.mxu0 0.0
    %93 = vmatpush1.msra.mxu0 0.0
    %94 = vmatprep.subr.mxu0 0.0
    %95 = vmatpush1.msra.mxu0 0.0
    %96 = vmatprep.subr.mxu0 0.0
    %97 = vmatpush1.msra.mxu0 0.0
    %98 = vmatprep.subr.mxu0 0.0
    %99 = vmatpush1.msra.mxu0 0.0
    %100 = vmatprep.subr.mxu0 0.0
    %101 = vmatpush1.msra.mxu0 0.0
    %102 = vmatprep.subr.mxu0 0.0
    %103 = vmatpush1.msra.mxu0 0.0
    %104 = vmatprep.subr.mxu0 0.0
    %105 = vmatpush1.msra.mxu0 0.0
    %106 = vmatprep.subr.mxu0 0.0
    %107 = vmatpush1.msra.mxu0 0.0
    %108 = vmatprep.subr.mxu0 0.0
    %109 = vmatpush1.msra.mxu0 0.0
    %110 = vmatprep.subr.mxu0 0.0
    %111 = vmatpush1.msra.mxu0 0.0
    %112 = vmatprep.subr.mxu0 0.0
    %113 = vmatpush1.msra.mxu0 0.0
    %114 = vmatprep.subr.mxu0 0.0
    %115 = vmatpush1.msra.mxu0 0.0
    %116 = vmatprep.subr.mxu0 0.0
    %117 = vmatpush1.msra.mxu0 0.0
    %118 = vmatprep.subr.mxu0 0.0
    %119 = vmatpush1.msra.mxu0 0.0
    %120 = vmatprep.subr.mxu0 0.0
    %121 = vmatpush1.msra.mxu0 0.0
    %122 = vmatprep.subr.mxu0 0.0
    %123 = vmatpush1.msra.mxu0 0.0
    %124 = vmatprep.subr.mxu0 0.0
    %125 = vmatpush1.msra.mxu0 0.0
    %126 = vmatprep.subr.mxu0 0.0
    %127 = vmatpush1.msra.mxu0 0.0
    %128 = vmatprep.subr.mxu0 0.0
    %129 = vmatpush1.msra.mxu0 0.0
    %130 = vmatprep.mubr.f32.mxu0 0.0
    %131 = vmatmul.mubr.f32.gmra.mrb[0].mxu0 %v61
    %v132 = vpop.f32.mrb[0].mxu0
    %v133 = vadd.f32 %v57, %v132
    %v134 = vpop.f32.mrb[0].mxu0
    %135 = vmatprep.mubr.f32.mxu0 0.0
    %136 = vmatmul.mubr.f32.gmra.mrb[0].mxu0 %v64
    %v137 = vpop.f32.mrb[0].mxu0
    %v138 = vadd.f32 %v57, %v137
    %v139 = vpop.f32.mrb[0].mxu0
    %140 = vdwg.mxu0
    %v141 = vld [vmem:[%s3] sm:$0xff]
    %v142 = vld [vmem:[%s3 + $0x8] sm:$0xff]
    %v143 = vld [vmem:[%s3 + $0x10] sm:$0xff]
    %v144 = vld [vmem:[%s3 + $0x18] sm:$0xff]
    %v145 = vld [vmem:[%s1] sm:$0x3]
    %s146 = smul.u32 0, 8
    %v147 = vld [vmem:[#allocation2] sm:$0x3]
    %v148 = vld [vmem:[#allocation3] sm:$0x3]
    %vm149 = vcmask 261120
    %v151 = vsel %vm149, %v147, 0
    %153 = vmatprep.subr.mxu0 0.0
    %154 = vmatpush1.msra.mxu0 %v141
    %155 = vmatprep.subr.mxu0 0.0
    %156 = vmatpush1.msra.mxu0 %v142
    %157 = vmatprep.subr.mxu0 0.0
    %158 = vmatpush1.msra.mxu0 %v143
    %159 = vmatprep.subr.mxu0 0.0
    %160 = vmatpush1.msra.mxu0 %v144
    %161 = vmatprep.subr.mxu0 0.0
    %162 = vmatpush1.msra.mxu0 0.0
    %163 = vmatprep.subr.mxu0 0.0
    %164 = vmatpush1.msra.mxu0 0.0
    %165 = vmatprep.subr.mxu0 0.0
    %166 = vmatpush1.msra.mxu0 0.0
    %167 = vmatprep.subr.mxu0 0.0
    %168 = vmatpush1.msra.mxu0 0.0
    %169 = vmatprep.subr.mxu0 0.0
    %170 = vmatpush1.msra.mxu0 0.0
    %171 = vmatprep.subr.mxu0 0.0
    %172 = vmatpush1.msra.mxu0 0.0
    %173 = vmatprep.subr.mxu0 0.0
    %174 = vmatpush1.msra.mxu0 0.0
    %175 = vmatprep.subr.mxu0 0.0
    %176 = vmatpush1.msra.mxu0 0.0
    %177 = vmatprep.subr.mxu0 0.0
    %178 = vmatpush1.msra.mxu0 0.0
    %179 = vmatprep.subr.mxu0 0.0
    %180 = vmatpush1.msra.mxu0 0.0
    %181 = vmatprep.subr.mxu0 0.0
    %182 = vmatpush1.msra.mxu0 0.0
    %183 = vmatprep.subr.mxu0 0.0
    %184 = vmatpush1.msra.mxu0 0.0
    %185 = vmatprep.subr.mxu0 0.0
    %186 = vmatpush1.msra.mxu0 0.0
    %187 = vmatprep.subr.mxu0 0.0
    %188 = vmatpush1.msra.mxu0 0.0
    %189 = vmatprep.subr.mxu0 0.0
    %190 = vmatpush1.msra.mxu0 0.0
    %191 = vmatprep.subr.mxu0 0.0
    %192 = vmatpush1.msra.mxu0 0.0
    %193 = vmatprep.subr.mxu0 0.0
    %194 = vmatpush1.msra.mxu0 0.0
    %195 = vmatprep.subr.mxu0 0.0
    %196 = vmatpush1.msra.mxu0 0.0
    %197 = vmatprep.subr.mxu0 0.0
    %198 = vmatpush1.msra.mxu0 0.0
    %199 = vmatprep.subr.mxu0 0.0
    %200 = vmatpush1.msra.mxu0 0.0
    %201 = vmatprep.subr.mxu0 0.0
    %202 = vmatpush1.msra.mxu0 0.0
    %203 = vmatprep.subr.mxu0 0.0
    %204 = vmatpush1.msra.mxu0 0.0
    %205 = vmatprep.subr.mxu0 0.0
    %206 = vmatpush1.msra.mxu0 0.0
    %207 = vmatprep.subr.mxu0 0.0
    %208 = vmatpush1.msra.mxu0 0.0
    %209 = vmatprep.subr.mxu0 0.0
    %210 = vmatpush1.msra.mxu0 0.0
    %211 = vmatprep.subr.mxu0 0.0
    %212 = vmatpush1.msra.mxu0 0.0
    %213 = vmatprep.subr.mxu0 0.0
    %214 = vmatpush1.msra.mxu0 0.0
    %215 = vmatprep.subr.mxu0 0.0
    %216 = vmatpush1.msra.mxu0 0.0
    %217 = vmatprep.mubr.f32.mxu0 0.0
    %218 = vmatmul.mubr.f32.gmra.mrb[0].mxu0 %v151
    %v219 = vpop.f32.mrb[0].mxu0
    %v220 = vadd.f32 0.0, %v219
    %v221 = vpop.f32.mrb[0].mxu0
    %222 = vdwg.mxu0
    %v224 = vrot.slane %v220, 1
    %v227 = vadd.f32 %v133, %v220
    %v228 = vadd.f32 %v138, %v224
    %v229 = vtanh.pop %v227
    %v230 = vtanh.pop %v228
    %v231 = vstv %s146
    %vm232 = vcmp.lt.s32.totalorder %v231, %v145
    %v233 = vsel %vm232, 1, 0
    %234 = vset.pattern.permute.xlu0 0
    %235 = vperm.xlu0 %234, %v233
    %v236 = vpop.permute.xlu0 %235
    %vm237 = vcmp.eq.s32.totalorder %v236, 1
    %v240 = vrot.slane %v230, 7
    %vm241 = vcmask 1041409
    %v242 = vsel %vm241, %v240, %v229
    %v244 = vsel %vm237, %v242, 0.0
    %v245 = vadd.f32 %v148, %v244
    %v246 = vsel %vm149, %v242, 0
    %248 = vmatprep.subr.mxu0 0.0
    %249 = vmatpush1.msra.mxu0 %v141
    %250 = vmatprep.subr.mxu0 0.0
    %251 = vmatpush1.msra.mxu0 %v142
    %252 = vmatprep.subr.mxu0 0.0
    %253 = vmatpush1.msra.mxu0 %v143
    %254 = vmatprep.subr.mxu0 0.0
    %255 = vmatpush1.msra.mxu0 %v144
    %256 = vmatprep.subr.mxu0 0.0
    %257 = vmatpush1.msra.mxu0 0.0
    %258 = vmatprep.subr.mxu0 0.0
    %259 = vmatpush1.msra.mxu0 0.0
    %260 = vmatprep.subr.mxu0 0.0
    %261 = vmatpush1.msra.mxu0 0.0
    %262 = vmatprep.subr.mxu0 0.0
    %263 = vmatpush1.msra.mxu0 0.0
    %264 = vmatprep.subr.mxu0 0.0
    %265 = vmatpush1.msra.mxu0 0.0
    %266 = vmatprep.subr.mxu0 0.0
    %267 = vmatpush1.msra.mxu0 0.0
    %268 = vmatprep.subr.mxu0 0.0
    %269 = vmatpush1.msra.mxu0 0.0
    %270 = vmatprep.subr.mxu0 0.0
    %271 = vmatpush1.msra.mxu0 0.0
    %272 = vmatprep.subr.mxu0 0.0
    %273 = vmatpush1.msra.mxu0 0.0
    %274 = vmatprep.subr.mxu0 0.0
    %275 = vmatpush1.msra.mxu0 0.0
    %276 = vmatprep.subr.mxu0 0.0
    %277 = vmatpush1.msra.mxu0 0.0
    %278 = vmatprep.subr.mxu0 0.0
    %279 = vmatpush1.msra.mxu0 0.0
    %280 = vmatprep.subr.mxu0 0.0
    %281 = vmatpush1.msra.mxu0 0.0
    %282 = vmatprep.subr.mxu0 0.0
    %283 = vmatpush1.msra.mxu0 0.0
    %284 = vmatprep.subr.mxu0 0.0
    %285 = vmatpush1.msra.mxu0 0.0
    %286 = vmatprep.subr.mxu0 0.0
    %287 = vmatpush1.msra.mxu0 0.0
    %288 = vmatprep.subr.mxu0 0.0
    %289 = vmatpush1.msra.mxu0 0.0
    %290 = vmatprep.subr.mxu0 0.0
    %291 = vmatpush1.msra.mxu0 0.0
    %292 = vmatprep.subr.mxu0 0.0
    %293 = vmatpush1.msra.mxu0 0.0
    %294 = vmatprep.subr.mxu0 0.0
    %295 = vmatpush1.msra.mxu0 0.0
    %296 = vmatprep.subr.mxu0 0.0
    %297 = vmatpush1.msra.mxu0 0.0
    %298 = vmatprep.subr.mxu0 0.0
    %299 = vmatpush1.msra.mxu0 0.0
    %300 = vmatprep.subr.mxu0 0.0
    %301 = vmatpush1.msra.mxu0 0.0
    %302 = vmatprep.subr.mxu0 0.0
    %303 = vmatpush1.msra.mxu0 0.0
    %304 = vmatprep.subr.mxu0 0.0
    %305 = vmatpush1.msra.mxu0 0.0
    %306 = vmatprep.subr.mxu0 0.0
    %307 = vmatpush1.msra.mxu0 0.0
    %308 = vmatprep.subr.mxu0 0.0
    %309 = vmatpush1.msra.mxu0 0.0
    %310 = vmatprep.subr.mxu0 0.0
    %311 = vmatpush1.msra.mxu0 0.0
    %312 = vmatprep.mubr.f32.mxu0 0.0
    %313 = vmatmul.mubr.f32.gmra.mrb[0].mxu0 %v246
    %v314 = vpop.f32.mrb[0].mxu0
    %v315 = vadd.f32 0.0, %v314
    %v316 = vpop.f32.mrb[0].mxu0
    %317 = vdwg.mxu0
    %v319 = vrot.slane %v315, 7
    %v322 = vadd.f32 %v133, %v319
    %v323 = vadd.f32 %v138, %v315
    %v324 = vtanh.pop %v322
    %v325 = vtanh.pop %v323
    %s326 = sadd.s32 %s146, 1
    %v327 = vstv %s326
    %vm328 = vcmp.lt.s32.totalorder %v327, %v145
    %v329 = vsel %vm328, 1, 0
    %330 = vset.pattern.permute.xlu0 0
    %331 = vperm.xlu0 %330, %v329
    %v332 = vpop.permute.xlu0 %331
    %vm333 = vcmp.eq.s32.totalorder %v332, 1
    %v336 = vrot.slane %v324, 1
    %v337 = vsel %vm241, %v325, %v336
    %v339 = vsel %vm333, %v337, 0.0
    %v340 = vadd.f32 %v245, %v339
    %v341 = vsel %vm149, %v337, 0
    %343 = vmatprep.subr.mxu0 0.0
    %344 = vmatpush1.msra.mxu0 %v141
    %345 = vmatprep.subr.mxu0 0.0
    %346 = vmatpush1.msra.mxu0 %v142
    %347 = vmatprep.subr.mxu0 0.0
    %348 = vmatpush1.msra.mxu0 %v143
    %349 = vmatprep.subr.mxu0 0.0
    %350 = vmatpush1.msra.mxu0 %v144
    %351 = vmatprep.subr.mxu0 0.0
    %352 = vmatpush1.msra.mxu0 0.0
    %353 = vmatprep.subr.mxu0 0.0
    %354 = vmatpush1.msra.mxu0 0.0
    %355 = vmatprep.subr.mxu0 0.0
    %356 = vmatpush1.msra.mxu0 0.0
    %357 = vmatprep.subr.mxu0 0.0
    %358 = vmatpush1.msra.mxu0 0.0
    %359 = vmatprep.subr.mxu0 0.0
    %360 = vmatpush1.msra.mxu0 0.0
    %361 = vmatprep.subr.mxu0 0.0
    %362 = vmatpush1.msra.mxu0 0.0
    %363 = vmatprep.subr.mxu0 0.0
    %364 = vmatpush1.msra.mxu0 0.0
    %365 = vmatprep.subr.mxu0 0.0
    %366 = vmatpush1.msra.mxu0 0.0
    %367 = vmatprep.subr.mxu0 0.0
    %368 = vmatpush1.msra.mxu0 0.0
    %369 = vmatprep.subr.mxu0 0.0
    %370 = vmatpush1.msra.mxu0 0.0
    %371 = vmatprep.subr.mxu0 0.0
    %372 = vmatpush1.msra.mxu0 0.0
    %373 = vmatprep.subr.mxu0 0.0
    %374 = vmatpush1.msra.mxu0 0.0
    %375 = vmatprep.subr.mxu0 0.0
    %376 = vmatpush1.msra.mxu0 0.0
    %377 = vmatprep.subr.mxu0 0.0
    %378 = vmatpush1.msra.mxu0 0.0
    %379 = vmatprep.subr.mxu0 0.0
    %380 = vmatpush1.msra.mxu0 0.0
    %381 = vmatprep.subr.mxu0 0.0
    %382 = vmatpush1.msra.mxu0 0.0
    %383 = vmatprep.subr.mxu0 0.0
    %384 = vmatpush1.msra.mxu0 0.0
    %385 = vmatprep.subr.mxu0 0.0
    %386 = vmatpush1.msra.mxu0 0.0
    %387 = vmatprep.subr.mxu0 0.0
    %388 = vmatpush1.msra.mxu0 0.0
    %389 = vmatprep.subr.mxu0 0.0
    %390 = vmatpush1.msra.mxu0 0.0
    %391 = vmatprep.subr.mxu0 0.0
    %392 = vmatpush1.msra.mxu0 0.0
    %393 = vmatprep.subr.mxu0 0.0
    %394 = vmatpush1.msra.mxu0 0.0
    %395 = vmatprep.subr.mxu0 0.0
    %396 = vmatpush1.msra.mxu0 0.0
    %397 = vmatprep.subr.mxu0 0.0
    %398 = vmatpush1.msra.mxu0 0.0
    %399 = vmatprep.subr.mxu0 0.0
    %400 = vmatpush1.msra.mxu0 0.0
    %401 = vmatprep.subr.mxu0 0.0
    %402 = vmatpush1.msra.mxu0 0.0
    %403 = vmatprep.subr.mxu0 0.0
    %404 = vmatpush1.msra.mxu0 0.0
    %405 = vmatprep.subr.mxu0 0.0
    %406 = vmatpush1.msra.mxu0 0.0
    %407 = vmatprep.mubr.f32.mxu0 0.0
    %408 = vmatmul.mubr.f32.gmra.mrb[0].mxu0 %v341
    %v409 = vpop.f32.mrb[0].mxu0
    %v410 = vadd.f32 0.0, %v409
    %v411 = vpop.f32.mrb[0].mxu0
    %412 = vdwg.mxu0
    %v414 = vrot.slane %v410, 6
    %v415 = vrot.slane %v410, 7
    %v418 = vadd.f32 %v133, %v414
    %v419 = vadd.f32 %v138, %v415
    %v420 = vtanh.pop %v418
    %v421 = vtanh.pop %v419
    %s422 = sadd.s32 %s146, 2
    %v423 = vstv %s422
    %vm424 = vcmp.lt.s32.totalorder %v423, %v145
    %v425 = vsel %vm424, 1, 0
    %426 = vset.pattern.permute.xlu0 0
    %427 = vperm.xlu0 %426, %v425
    %v428 = vpop.permute.xlu0 %427
    %vm429 = vcmp.eq.s32.totalorder %v428, 1
    %v432 = vrot.slane %v420, 2
    %v433 = vrot.slane %v421, 1
    %v434 = vsel %vm241, %v433, %v432
    %v436 = vsel %vm429, %v434, 0.0
    %v437 = vadd.f32 %v340, %v436
    %v438 = vsel %vm149, %v434, 0
    %440 = vmatprep.subr.mxu0 0.0
    %441 = vmatpush1.msra.mxu0 %v141
    %442 = vmatprep.subr.mxu0 0.0
    %443 = vmatpush1.msra.mxu0 %v142
    %444 = vmatprep.subr.mxu0 0.0
    %445 = vmatpush1.msra.mxu0 %v143
    %446 = vmatprep.subr.mxu0 0.0
    %447 = vmatpush1.msra.mxu0 %v144
    %448 = vmatprep.subr.mxu0 0.0
    %449 = vmatpush1.msra.mxu0 0.0
    %450 = vmatprep.subr.mxu0 0.0
    %451 = vmatpush1.msra.mxu0 0.0
    %452 = vmatprep.subr.mxu0 0.0
    %453 = vmatpush1.msra.mxu0 0.0
    %454 = vmatprep.subr.mxu0 0.0
    %455 = vmatpush1.msra.mxu0 0.0
    %456 = vmatprep.subr.mxu0 0.0
    %457 = vmatpush1.msra.mxu0 0.0
    %458 = vmatprep.subr.mxu0 0.0
    %459 = vmatpush1.msra.mxu0 0.0
    %460 = vmatprep.subr.mxu0 0.0
    %461 = vmatpush1.msra.mxu0 0.0
    %462 = vmatprep.subr.mxu0 0.0
    %463 = vmatpush1.msra.mxu0 0.0
    %464 = vmatprep.subr.mxu0 0.0
    %465 = vmatpush1.msra.mxu0 0.0
    %466 = vmatprep.subr.mxu0 0.0
    %467 = vmatpush1.msra.mxu0 0.0
    %468 = vmatprep.subr.mxu0 0.0
    %469 = vmatpush1.msra.mxu0 0.0
    %470 = vmatprep.subr.mxu0 0.0
    %471 = vmatpush1.msra.mxu0 0.0
    %472 = vmatprep.subr.mxu0 0.0
    %473 = vmatpush1.msra.mxu0 0.0
    %474 = vmatprep.subr.mxu0 0.0
    %475 = vmatpush1.msra.mxu0 0.0
    %476 = vmatprep.subr.mxu0 0.0
    %477 = vmatpush1.msra.mxu0 0.0
    %478 = vmatprep.subr.mxu0 0.0
    %479 = vmatpush1.msra.mxu0 0.0
    %480 = vmatprep.subr.mxu0 0.0
    %481 = vmatpush1.msra.mxu0 0.0
    %482 = vmatprep.subr.mxu0 0.0
    %483 = vmatpush1.msra.mxu0 0.0
    %484 = vmatprep.subr.mxu0 0.0
    %485 = vmatpush1.msra.mxu0 0.0
    %486 = vmatprep.subr.mxu0 0.0
    %487 = vmatpush1.msra.mxu0 0.0
    %488 = vmatprep.subr.mxu0 0.0
    %489 = vmatpush1.msra.mxu0 0.0
    %490 = vmatprep.subr.mxu0 0.0
    %491 = vmatpush1.msra.mxu0 0.0
    %492 = vmatprep.subr.mxu0 0.0
    %493 = vmatpush1.msra.mxu0 0.0
    %494 = vmatprep.subr.mxu0 0.0
    %495 = vmatpush1.msra.mxu0 0.0
    %496 = vmatprep.subr.mxu0 0.0
    %497 = vmatpush1.msra.mxu0 0.0
    %498 = vmatprep.subr.mxu0 0.0
    %499 = vmatpush1.msra.mxu0 0.0
    %500 = vmatprep.subr.mxu0 0.0
    %501 = vmatpush1.msra.mxu0 0.0
    %502 = vmatprep.subr.mxu0 0.0
    %503 = vmatpush1.msra.mxu0 0.0
    %504 = vmatprep.mubr.f32.mxu0 0.0
    %505 = vmatmul.mubr.f32.gmra.mrb[0].mxu0 %v438
    %v506 = vpop.f32.mrb[0].mxu0
    %v507 = vadd.f32 0.0, %v506
    %v508 = vpop.f32.mrb[0].mxu0
    %509 = vdwg.mxu0
    %v511 = vrot.slane %v507, 5
    %v512 = vrot.slane %v507, 6
    %v515 = vadd.f32 %v133, %v511
    %v516 = vadd.f32 %v138, %v512
    %v517 = vtanh.pop %v515
    %v518 = vtanh.pop %v516
    %s519 = sadd.s32 %s146, 3
    %v520 = vstv %s519
    %vm521 = vcmp.lt.s32.totalorder %v520, %v145
    %v522 = vsel %vm521, 1, 0
    %523 = vset.pattern.permute.xlu0 0
    %524 = vperm.xlu0 %523, %v522
    %v525 = vpop.permute.xlu0 %524
    %vm526 = vcmp.eq.s32.totalorder %v525, 1
    %v529 = vrot.slane %v517, 3
    %v530 = vrot.slane %v518, 2
    %v531 = vsel %vm241, %v530, %v529
    %v533 = vsel %vm526, %v531, 0.0
    %v534 = vadd.f32 %v437, %v533
    %v535 = vsel %vm149, %v531, 0
    %537 = vmatprep.subr.mxu0 0.0
    %538 = vmatpush1.msra.mxu0 %v141
    %539 = vmatprep.subr.mxu0 0.0
    %540 = vmatpush1.msra.mxu0 %v142
    %541 = vmatprep.subr.mxu0 0.0
    %542 = vmatpush1.msra.mxu0 %v143
    %543 = vmatprep.subr.mxu0 0.0
    %544 = vmatpush1.msra.mxu0 %v144
    %545 = vmatprep.subr.mxu0 0.0
    %546 = vmatpush1.msra.mxu0 0.0
    %547 = vmatprep.subr.mxu0 0.0
    %548 = vmatpush1.msra.mxu0 0.0
    %549 = vmatprep.subr.mxu0 0.0
    %550 = vmatpush1.msra.mxu0 0.0
    %551 = vmatprep.subr.mxu0 0.0
    %552 = vmatpush1.msra.mxu0 0.0
    %553 = vmatprep.subr.mxu0 0.0
    %554 = vmatpush1.msra.mxu0 0.0
    %555 = vmatprep.subr.mxu0 0.0
    %556 = vmatpush1.msra.mxu0 0.0
    %557 = vmatprep.subr.mxu0 0.0
    %558 = vmatpush1.msra.mxu0 0.0
    %559 = vmatprep.subr.mxu0 0.0
    %560 = vmatpush1.msra.mxu0 0.0
    %561 = vmatprep.subr.mxu0 0.0
    %562 = vmatpush1.msra.mxu0 0.0
    %563 = vmatprep.subr.mxu0 0.0
    %564 = vmatpush1.msra.mxu0 0.0
    %565 = vmatprep.subr.mxu0 0.0
    %566 = vmatpush1.msra.mxu0 0.0
    %567 = vmatprep.subr.mxu0 0.0
    %568 = vmatpush1.msra.mxu0 0.0
    %569 = vmatprep.subr.mxu0 0.0
    %570 = vmatpush1.msra.mxu0 0.0
    %571 = vmatprep.subr.mxu0 0.0
    %572 = vmatpush1.msra.mxu0 0.0
    %573 = vmatprep.subr.mxu0 0.0
    %574 = vmatpush1.msra.mxu0 0.0
    %575 = vmatprep.subr.mxu0 0.0
    %576 = vmatpush1.msra.mxu0 0.0
    %577 = vmatprep.subr.mxu0 0.0
    %578 = vmatpush1.msra.mxu0 0.0
    %579 = vmatprep.subr.mxu0 0.0
    %580 = vmatpush1.msra.mxu0 0.0
    %581 = vmatprep.subr.mxu0 0.0
    %582 = vmatpush1.msra.mxu0 0.0
    %583 = vmatprep.subr.mxu0 0.0
    %584 = vmatpush1.msra.mxu0 0.0
    %585 = vmatprep.subr.mxu0 0.0
    %586 = vmatpush1.msra.mxu0 0.0
    %587 = vmatprep.subr.mxu0 0.0
    %588 = vmatpush1.msra.mxu0 0.0
    %589 = vmatprep.subr.mxu0 0.0
    %590 = vmatpush1.msra.mxu0 0.0
    %591 = vmatprep.subr.mxu0 0.0
    %592 = vmatpush1.msra.mxu0 0.0
    %593 = vmatprep.subr.mxu0 0.0
    %594 = vmatpush1.msra.mxu0 0.0
    %595 = vmatprep.subr.mxu0 0.0
    %596 = vmatpush1.msra.mxu0 0.0
    %597 = vmatprep.subr.mxu0 0.0
    %598 = vmatpush1.msra.mxu0 0.0
    %599 = vmatprep.subr.mxu0 0.0
    %600 = vmatpush1.msra.mxu0 0.0
    %601 = vmatprep.mubr.f32.mxu0 0.0
    %602 = vmatmul.mubr.f32.gmra.mrb[0].mxu0 %v535
    %v603 = vpop.f32.mrb[0].mxu0
    %v604 = vadd.f32 0.0, %v603
    %v605 = vpop.f32.mrb[0].mxu0
    %606 = vdwg.mxu0
    %v608 = vrot.slane %v604, 4
    %v609 = vrot.slane %v604, 5
    %v612 = vadd.f32 %v133, %v608
    %v613 = vadd.f32 %v138, %v609
    %v614 = vtanh.pop %v612
    %v615 = vtanh.pop %v613
    %s616 = sadd.s32 %s146, 4
    %v617 = vstv %s616
    %vm618 = vcmp.lt.s32.totalorder %v617, %v145
    %v619 = vsel %vm618, 1, 0
    %620 = vset.pattern.permute.xlu0 0
    %621 = vperm.xlu0 %620, %v619
    %v622 = vpop.permute.xlu0 %621
    %vm623 = vcmp.eq.s32.totalorder %v622, 1
    %v626 = vrot.slane %v614, 4
    %v627 = vrot.slane %v615, 3
    %v628 = vsel %vm241, %v627, %v626
    %v630 = vsel %vm623, %v628, 0.0
    %v631 = vadd.f32 %v534, %v630
    %v632 = vsel %vm149, %v628, 0
    %634 = vmatprep.subr.mxu0 0.0
    %635 = vmatpush1.msra.mxu0 %v141
    %636 = vmatprep.subr.mxu0 0.0
    %637 = vmatpush1.msra.mxu0 %v142
    %638 = vmatprep.subr.mxu0 0.0
    %639 = vmatpush1.msra.mxu0 %v143
    %640 = vmatprep.subr.mxu0 0.0
    %641 = vmatpush1.msra.mxu0 %v144
    %642 = vmatprep.subr.mxu0 0.0
    %643 = vmatpush1.msra.mxu0 0.0
    %644 = vmatprep.subr.mxu0 0.0
    %645 = vmatpush1.msra.mxu0 0.0
    %646 = vmatprep.subr.mxu0 0.0
    %647 = vmatpush1.msra.mxu0 0.0
    %648 = vmatprep.subr.mxu0 0.0
    %649 = vmatpush1.msra.mxu0 0.0
    %650 = vmatprep.subr.mxu0 0.0
    %651 = vmatpush1.msra.mxu0 0.0
    %652 = vmatprep.subr.mxu0 0.0
    %653 = vmatpush1.msra.mxu0 0.0
    %654 = vmatprep.subr.mxu0 0.0
    %655 = vmatpush1.msra.mxu0 0.0
    %656 = vmatprep.subr.mxu0 0.0
    %657 = vmatpush1.msra.mxu0 0.0
    %658 = vmatprep.subr.mxu0 0.0
    %659 = vmatpush1.msra.mxu0 0.0
    %660 = vmatprep.subr.mxu0 0.0
    %661 = vmatpush1.msra.mxu0 0.0
    %662 = vmatprep.subr.mxu0 0.0
    %663 = vmatpush1.msra.mxu0 0.0
    %664 = vmatprep.subr.mxu0 0.0
    %665 = vmatpush1.msra.mxu0 0.0
    %666 = vmatprep.subr.mxu0 0.0
    %667 = vmatpush1.msra.mxu0 0.0
    %668 = vmatprep.subr.mxu0 0.0
    %669 = vmatpush1.msra.mxu0 0.0
    %670 = vmatprep.subr.mxu0 0.0
    %671 = vmatpush1.msra.mxu0 0.0
    %672 = vmatprep.subr.mxu0 0.0
    %673 = vmatpush1.msra.mxu0 0.0
    %674 = vmatprep.subr.mxu0 0.0
    %675 = vmatpush1.msra.mxu0 0.0
    %676 = vmatprep.subr.mxu0 0.0
    %677 = vmatpush1.msra.mxu0 0.0
    %678 = vmatprep.subr.mxu0 0.0
    %679 = vmatpush1.msra.mxu0 0.0
    %680 = vmatprep.subr.mxu0 0.0
    %681 = vmatpush1.msra.mxu0 0.0
    %682 = vmatprep.subr.mxu0 0.0
    %683 = vmatpush1.msra.mxu0 0.0
    %684 = vmatprep.subr.mxu0 0.0
    %685 = vmatpush1.msra.mxu0 0.0
    %686 = vmatprep.subr.mxu0 0.0
    %687 = vmatpush1.msra.mxu0 0.0
    %688 = vmatprep.subr.mxu0 0.0
    %689 = vmatpush1.msra.mxu0 0.0
    %690 = vmatprep.subr.mxu0 0.0
    %691 = vmatpush1.msra.mxu0 0.0
    %692 = vmatprep.subr.mxu0 0.0
    %693 = vmatpush1.msra.mxu0 0.0
    %694 = vmatprep.subr.mxu0 0.0
    %695 = vmatpush1.msra.mxu0 0.0
    %696 = vmatprep.subr.mxu0 0.0
    %697 = vmatpush1.msra.mxu0 0.0
    %698 = vmatprep.mubr.f32.mxu0 0.0
    %699 = vmatmul.mubr.f32.gmra.mrb[0].mxu0 %v632
    %v700 = vpop.f32.mrb[0].mxu0
    %v701 = vadd.f32 0.0, %v700
    %v702 = vpop.f32.mrb[0].mxu0
    %703 = vdwg.mxu0
    %v705 = vrot.slane %v701, 3
    %v706 = vrot.slane %v701, 4
    %v709 = vadd.f32 %v133, %v705
    %v710 = vadd.f32 %v138, %v706
    %v711 = vtanh.pop %v709
    %v712 = vtanh.pop %v710
    %s713 = sadd.s32 %s146, 5
    %v714 = vstv %s713
    %vm715 = vcmp.lt.s32.totalorder %v714, %v145
    %v716 = vsel %vm715, 1, 0
    %717 = vset.pattern.permute.xlu0 0
    %718 = vperm.xlu0 %717, %v716
    %v719 = vpop.permute.xlu0 %718
    %vm720 = vcmp.eq.s32.totalorder %v719, 1
    %v723 = vrot.slane %v711, 5
    %v724 = vrot.slane %v712, 4
    %v725 = vsel %vm241, %v724, %v723
    %v727 = vsel %vm720, %v725, 0.0
    %v728 = vadd.f32 %v631, %v727
    %v729 = vsel %vm149, %v725, 0
    %731 = vmatprep.subr.mxu0 0.0
    %732 = vmatpush1.msra.mxu0 %v141
    %733 = vmatprep.subr.mxu0 0.0
    %734 = vmatpush1.msra.mxu0 %v142
    %735 = vmatprep.subr.mxu0 0.0
    %736 = vmatpush1.msra.mxu0 %v143
    %737 = vmatprep.subr.mxu0 0.0
    %738 = vmatpush1.msra.mxu0 %v144
    %739 = vmatprep.subr.mxu0 0.0
    %740 = vmatpush1.msra.mxu0 0.0
    %741 = vmatprep.subr.mxu0 0.0
    %742 = vmatpush1.msra.mxu0 0.0
    %743 = vmatprep.subr.mxu0 0.0
    %744 = vmatpush1.msra.mxu0 0.0
    %745 = vmatprep.subr.mxu0 0.0
    %746 = vmatpush1.msra.mxu0 0.0
    %747 = vmatprep.subr.mxu0 0.0
    %748 = vmatpush1.msra.mxu0 0.0
    %749 = vmatprep.subr.mxu0 0.0
    %750 = vmatpush1.msra.mxu0 0.0
    %751 = vmatprep.subr.mxu0 0.0
    %752 = vmatpush1.msra.mxu0 0.0
    %753 = vmatprep.subr.mxu0 0.0
    %754 = vmatpush1.msra.mxu0 0.0
    %755 = vmatprep.subr.mxu0 0.0
    %756 = vmatpush1.msra.mxu0 0.0
    %757 = vmatprep.subr.mxu0 0.0
    %758 = vmatpush1.msra.mxu0 0.0
    %759 = vmatprep.subr.mxu0 0.0
    %760 = vmatpush1.msra.mxu0 0.0
    %761 = vmatprep.subr.mxu0 0.0
    %762 = vmatpush1.msra.mxu0 0.0
    %763 = vmatprep.subr.mxu0 0.0
    %764 = vmatpush1.msra.mxu0 0.0
    %765 = vmatprep.subr.mxu0 0.0
    %766 = vmatpush1.msra.mxu0 0.0
    %767 = vmatprep.subr.mxu0 0.0
    %768 = vmatpush1.msra.mxu0 0.0
    %769 = vmatprep.subr.mxu0 0.0
    %770 = vmatpush1.msra.mxu0 0.0
    %771 = vmatprep.subr.mxu0 0.0
    %772 = vmatpush1.msra.mxu0 0.0
    %773 = vmatprep.subr.mxu0 0.0
    %774 = vmatpush1.msra.mxu0 0.0
    %775 = vmatprep.subr.mxu0 0.0
    %776 = vmatpush1.msra.mxu0 0.0
    %777 = vmatprep.subr.mxu0 0.0
    %778 = vmatpush1.msra.mxu0 0.0
    %779 = vmatprep.subr.mxu0 0.0
    %780 = vmatpush1.msra.mxu0 0.0
    %781 = vmatprep.subr.mxu0 0.0
    %782 = vmatpush1.msra.mxu0 0.0
    %783 = vmatprep.subr.mxu0 0.0
    %784 = vmatpush1.msra.mxu0 0.0
    %785 = vmatprep.subr.mxu0 0.0
    %786 = vmatpush1.msra.mxu0 0.0
    %787 = vmatprep.subr.mxu0 0.0
    %788 = vmatpush1.msra.mxu0 0.0
    %789 = vmatprep.subr.mxu0 0.0
    %790 = vmatpush1.msra.mxu0 0.0
    %791 = vmatprep.subr.mxu0 0.0
    %792 = vmatpush1.msra.mxu0 0.0
    %793 = vmatprep.subr.mxu0 0.0
    %794 = vmatpush1.msra.mxu0 0.0
    %795 = vmatprep.mubr.f32.mxu0 0.0
    %796 = vmatmul.mubr.f32.gmra.mrb[0].mxu0 %v729
    %v797 = vpop.f32.mrb[0].mxu0
    %v798 = vadd.f32 0.0, %v797
    %v799 = vpop.f32.mrb[0].mxu0
    %800 = vdwg.mxu0
    %v802 = vrot.slane %v798, 2
    %v803 = vrot.slane %v798, 3
    %v806 = vadd.f32 %v133, %v802
    %v807 = vadd.f32 %v138, %v803
    %v808 = vtanh.pop %v806
    %v809 = vtanh.pop %v807
    %s810 = sadd.s32 %s146, 6
    %v811 = vstv %s810
    %vm812 = vcmp.lt.s32.totalorder %v811, %v145
    %v813 = vsel %vm812, 1, 0
    %814 = vset.pattern.permute.xlu0 0
    %815 = vperm.xlu0 %814, %v813
    %v816 = vpop.permute.xlu0 %815
    %vm817 = vcmp.eq.s32.totalorder %v816, 1
    %v820 = vrot.slane %v808, 6
    %v821 = vrot.slane %v809, 5
    %v822 = vsel %vm241, %v821, %v820
    %v824 = vsel %vm817, %v822, 0.0
    %v825 = vadd.f32 %v728, %v824
    %v826 = vsel %vm149, %v822, 0
    %828 = vmatprep.subr.mxu0 0.0
    %829 = vmatpush1.msra.mxu0 %v141
    %830 = vmatprep.subr.mxu0 0.0
    %831 = vmatpush1.msra.mxu0 %v142
    %832 = vmatprep.subr.mxu0 0.0
    %833 = vmatpush1.msra.mxu0 %v143
    %834 = vmatprep.subr.mxu0 0.0
    %835 = vmatpush1.msra.mxu0 %v144
    %836 = vmatprep.subr.mxu0 0.0
    %837 = vmatpush1.msra.mxu0 0.0
    %838 = vmatprep.subr.mxu0 0.0
    %839 = vmatpush1.msra.mxu0 0.0
    %840 = vmatprep.subr.mxu0 0.0
    %841 = vmatpush1.msra.mxu0 0.0
    %842 = vmatprep.subr.mxu0 0.0
    %843 = vmatpush1.msra.mxu0 0.0
    %844 = vmatprep.subr.mxu0 0.0
    %845 = vmatpush1.msra.mxu0 0.0
    %846 = vmatprep.subr.mxu0 0.0
    %847 = vmatpush1.msra.mxu0 0.0
    %848 = vmatprep.subr.mxu0 0.0
    %849 = vmatpush1.msra.mxu0 0.0
    %850 = vmatprep.subr.mxu0 0.0
    %851 = vmatpush1.msra.mxu0 0.0
    %852 = vmatprep.subr.mxu0 0.0
    %853 = vmatpush1.msra.mxu0 0.0
    %854 = vmatprep.subr.mxu0 0.0
    %855 = vmatpush1.msra.mxu0 0.0
    %856 = vmatprep.subr.mxu0 0.0
    %857 = vmatpush1.msra.mxu0 0.0
    %858 = vmatprep.subr.mxu0 0.0
    %859 = vmatpush1.msra.mxu0 0.0
    %860 = vmatprep.subr.mxu0 0.0
    %861 = vmatpush1.msra.mxu0 0.0
    %862 = vmatprep.subr.mxu0 0.0
    %863 = vmatpush1.msra.mxu0 0.0
    %864 = vmatprep.subr.mxu0 0.0
    %865 = vmatpush1.msra.mxu0 0.0
    %866 = vmatprep.subr.mxu0 0.0
    %867 = vmatpush1.msra.mxu0 0.0
    %868 = vmatprep.subr.mxu0 0.0
    %869 = vmatpush1.msra.mxu0 0.0
    %870 = vmatprep.subr.mxu0 0.0
    %871 = vmatpush1.msra.mxu0 0.0
    %872 = vmatprep.subr.mxu0 0.0
    %873 = vmatpush1.msra.mxu0 0.0
    %874 = vmatprep.subr.mxu0 0.0
    %875 = vmatpush1.msra.mxu0 0.0
    %876 = vmatprep.subr.mxu0 0.0
    %877 = vmatpush1.msra.mxu0 0.0
    %878 = vmatprep.subr.mxu0 0.0
    %879 = vmatpush1.msra.mxu0 0.0
    %880 = vmatprep.subr.mxu0 0.0
    %881 = vmatpush1.msra.mxu0 0.0
    %882 = vmatprep.subr.mxu0 0.0
    %883 = vmatpush1.msra.mxu0 0.0
    %884 = vmatprep.subr.mxu0 0.0
    %885 = vmatpush1.msra.mxu0 0.0
    %886 = vmatprep.subr.mxu0 0.0
    %887 = vmatpush1.msra.mxu0 0.0
    %888 = vmatprep.subr.mxu0 0.0
    %889 = vmatpush1.msra.mxu0 0.0
    %890 = vmatprep.subr.mxu0 0.0
    %891 = vmatpush1.msra.mxu0 0.0
    %892 = vmatprep.mubr.f32.mxu0 0.0
    %893 = vmatmul.mubr.f32.gmra.mrb[0].mxu0 %v826
    %v894 = vpop.f32.mrb[0].mxu0
    %v895 = vadd.f32 0.0, %v894
    %v896 = vpop.f32.mrb[0].mxu0
    %897 = vdwg.mxu0
    %v899 = vrot.slane %v895, 1
    %v900 = vrot.slane %v895, 2
    %v903 = vadd.f32 %v133, %v899
    %v904 = vadd.f32 %v138, %v900
    %v905 = vtanh.pop %v903
    %v906 = vtanh.pop %v904
    %s907 = sadd.s32 %s146, 7
    %v908 = vstv %s907
    %vm909 = vcmp.lt.s32.totalorder %v908, %v145
    %v910 = vsel %vm909, 1, 0
    %911 = vset.pattern.permute.xlu0 0
    %912 = vperm.xlu0 %911, %v910
    %v913 = vpop.permute.xlu0 %912
    %vm914 = vcmp.eq.s32.totalorder %v913, 1
    %v917 = vrot.slane %v905, 7
    %v918 = vrot.slane %v906, 6
    %v919 = vsel %vm241, %v918, %v917
    %v921 = vsel %vm914, %v919, 0.0
    %v922 = vadd.f32 %v825, %v921
    %v923 = vrot.slane %v906, 7
    %vm926 = vcmask 261127
    %927 = vst.msk [vmem:[#allocation2 - $0x7] sm:$0x80] %vm926, %v905
    %vm928 = vcmask 253952
    %929 = vst.msk [vmem:[#allocation2 + $0x1] sm:$0x1] %vm928, %v923
    %vm930 = vcmask 254976
    %931 = vst.msk [vmem:[#allocation3] sm:$0x3] %vm930, %v922
    // Predicated region
    $region38: #{tpu_custom_call.1} parent=1 // pred_check
      %p932 = pneg %p41
    $region39: #{tpu_custom_call.1} parent=1 // pred_check_branch
      %934 = sbr.rel (%p932) target = $region41
    $region40: #{tpu_custom_call.1} parent=1 // pred_region
      %v935 = vld [vmem:[%s5] sm:$0xff]
      %v936 = vld [vmem:[%s5 + $0x8] sm:$0xff]
      %v937 = vld [vmem:[%s5 + $0x10] sm:$0xff]
      %v938 = vld [vmem:[%s5 + $0x18] sm:$0xff]
      %v939 = vld [vmem:[%s6] sm:$0x1]
      %v941 = vlaneseq
      %v942 = vshrl.u32 %v941, 7
      %v943 = vsub.s32 0, %v942
      %v944 = vrot.slane %v939, %v943
      %v947 = vsel %vm149, %v922, 0
      %949 = vmatprep.subr.mxu0 0.0
      %950 = vmatpush1.msra.mxu0 %v935
      %951 = vmatprep.subr.mxu0 0.0
      %952 = vmatpush1.msra.mxu0 %v936
      %953 = vmatprep.subr.mxu0 0.0
      %954 = vmatpush1.msra.mxu0 %v937
      %955 = vmatprep.subr.mxu0 0.0
      %956 = vmatpush1.msra.mxu0 %v938
      %957 = vmatprep.subr.mxu0 0.0
      %958 = vmatpush1.msra.mxu0 0.0
      %959 = vmatprep.subr.mxu0 0.0
      %960 = vmatpush1.msra.mxu0 0.0
      %961 = vmatprep.subr.mxu0 0.0
      %962 = vmatpush1.msra.mxu0 0.0
      %963 = vmatprep.subr.mxu0 0.0
      %964 = vmatpush1.msra.mxu0 0.0
      %965 = vmatprep.subr.mxu0 0.0
      %966 = vmatpush1.msra.mxu0 0.0
      %967 = vmatprep.subr.mxu0 0.0
      %968 = vmatpush1.msra.mxu0 0.0
      %969 = vmatprep.subr.mxu0 0.0
      %970 = vmatpush1.msra.mxu0 0.0
      %971 = vmatprep.subr.mxu0 0.0
      %972 = vmatpush1.msra.mxu0 0.0
      %973 = vmatprep.subr.mxu0 0.0
      %974 = vmatpush1.msra.mxu0 0.0
      %975 = vmatprep.subr.mxu0 0.0
      %976 = vmatpush1.msra.mxu0 0.0
      %977 = vmatprep.subr.mxu0 0.0
      %978 = vmatpush1.msra.mxu0 0.0
      %979 = vmatprep.subr.mxu0 0.0
      %980 = vmatpush1.msra.mxu0 0.0
      %981 = vmatprep.subr.mxu0 0.0
      %982 = vmatpush1.msra.mxu0 0.0
      %983 = vmatprep.subr.mxu0 0.0
      %984 = vmatpush1.msra.mxu0 0.0
      %985 = vmatprep.subr.mxu0 0.0
      %986 = vmatpush1.msra.mxu0 0.0
      %987 = vmatprep.subr.mxu0 0.0
      %988 = vmatpush1.msra.mxu0 0.0
      %989 = vmatprep.subr.mxu0 0.0
      %990 = vmatpush1.msra.mxu0 0.0
      %991 = vmatprep.subr.mxu0 0.0
      %992 = vmatpush1.msra.mxu0 0.0
      %993 = vmatprep.subr.mxu0 0.0
      %994 = vmatpush1.msra.mxu0 0.0
      %995 = vmatprep.subr.mxu0 0.0
      %996 = vmatpush1.msra.mxu0 0.0
      %997 = vmatprep.subr.mxu0 0.0
      %998 = vmatpush1.msra.mxu0 0.0
      %999 = vmatprep.subr.mxu0 0.0
      %1000 = vmatpush1.msra.mxu0 0.0
      %1001 = vmatprep.subr.mxu0 0.0
      %1002 = vmatpush1.msra.mxu0 0.0
      %1003 = vmatprep.subr.mxu0 0.0
      %1004 = vmatpush1.msra.mxu0 0.0
      %1005 = vmatprep.subr.mxu0 0.0
      %1006 = vmatpush1.msra.mxu0 0.0
      %1007 = vmatprep.subr.mxu0 0.0
      %1008 = vmatpush1.msra.mxu0 0.0
      %1009 = vmatprep.subr.mxu0 0.0
      %1010 = vmatpush1.msra.mxu0 0.0
      %1011 = vmatprep.subr.mxu0 0.0
      %1012 = vmatpush1.msra.mxu0 0.0
      %1013 = vmatprep.mubr.f32.mxu0 0.0
      %1014 = vmatmul.mubr.f32.gmra.mrb[0].mxu0 %v947
      %v1015 = vpop.f32.mrb[0].mxu0
      %v1016 = vadd.f32 %v944, %v1015
      %v1017 = vpop.f32.mrb[0].mxu0
      %1018 = vdwg.mxu0
      %vm1019 = vcmask 33792
      %v1020 = vsel %vm1019, %v1016, -inf
      %1021 = vmax.xlane.f32.xlu0 %v1020
      %v1022 = vpop.xlane.xlu0 %1021
      %v1023 = vsub.f32 %v1016, %v1022
      %v1024 = vmul.f32 %v1023, 1.442695
      %v1025 = vpow.pop %v1024
      %v1026 = vsel %vm1019, %v1025, 0.0
      %1027 = vadd.xlane.f32.xlu0 %v1026
      %v1028 = vpop.xlane.xlu0 %1027
      %v1029 = vlog2.pop %v1028
      %v1030 = vmul.f32 %v1029, 0.6931472
      %v1031 = vsub.f32 %v1023, %v1030
      %1032 = vst.msk [vmem:[#allocation7] sm:$0x3] %vm1019, %v1031
    $region41: #{tpu_custom_call.1} parent=1 // pred_fallthru
      _
    // Predicated region
    $region42: #{tpu_custom_call.1} parent=1 // pred_check
      _
    $region43: #{tpu_custom_call.1} parent=1 // pred_check_branch
      %1034 = sbr.rel (0) target = $region45
    $region44: #{tpu_custom_call.1} parent=1 // pred_region
      %s1036 = ssub.s32 32, 32
      %1037 = vsyncadd [#allocation6], %s1036
      %s1039 = sshll.u32 [#allocation7], 4
      %s1040 = int_to_ptr.vmem [resolvable:$true] %s1039
      %1042 = dma.vmem_to_hbm [thread:$0]  %s1040, 32, %s7, [#allocation6]
    $region45: #{tpu_custom_call.1} parent=1 // pred_fallthru
      _
    // Predicated region
    $region46: #{tpu_custom_call.1} parent=1 // pred_check
      _
    $region47: #{tpu_custom_call.1} parent=1 // pred_check_branch
      %1044 = sbr.rel (0) target = $region49
    $region48: #{tpu_custom_call.1} parent=1 // pred_region
      %1045 = dma.done [#allocation6], 32
    $region49: #{tpu_custom_call.1} parent=1 // pred_fallthru
      _
    %1046 = vsyncpa [#allocation5], 1
    %1047 = vsyncpa [#allocation6], 1

</llo_original>
